<compile_context>
chip_gen: v7x
topology: tpu7x:2x2x1
jax: 0.10.0
libtpu: 0.0.40
codegen_flags: <defaults>
</compile_context>

<pallas_src>
import jax
import jax.numpy as jnp
from jax.experimental import pallas as pl
from jax.experimental.pallas import tpu as pltpu


def _round_up(x, m):
    return (x + m - 1) // m * m


# ---------------------------------------------------------------------------
# Kernel
# ---------------------------------------------------------------------------
def decoder_scvi_kernel(z_ref, ll_ref, w1_ref, b1_ref, wh_ref, bh_ref,
                        scale_ref, r_ref, rate_ref, drop_ref):
    n_out = scale_ref.shape[-1]          # padded gene count (multiple of 128)
    out_dtype = scale_ref.dtype

    # px_decoder: Linear(n_input -> n_hidden) + ReLU (f32 accumulation).
    # n_input <= 128 -> single MXU K pass, no K grid axis needed.
    px = jnp.dot(z_ref[...], w1_ref[...], preferred_element_type=jnp.float32)
    px = jnp.maximum(px + b1_ref[...], 0.0)
    px = px.astype(wh_ref.dtype)

    def head(k):
        # Lane-aligned static slice of the fused (n_hidden, 3*n_out_pad) weight.
        w = wh_ref[:, pl.ds(k * n_out, n_out)]
        b = bh_ref[:, pl.ds(k * n_out, n_out)]
        return jnp.dot(px, w, preferred_element_type=jnp.float32) + b

    # r / dropout heads stream straight to their outputs so only one
    # (tile_b, n_out_pad) f32 intermediate is live at a time.
    r_ref[...] = head(1).astype(out_dtype)
    drop_ref[...] = head(2).astype(out_dtype)

    # scale head: exact softmax over the (padded) gene axis.  Padded logits
    # were biased to -1e30 at prepare_params() time so exp() kills them.
    logits = head(0)
    m = jnp.max(logits, axis=-1, keepdims=True)
    e = jnp.exp(logits - m)
    s = jnp.sum(e, axis=-1, keepdims=True)
    scale = e / s                         # exact normalization
    scale_ref[...] = scale.astype(out_dtype)
    # px_rate = exp(log_library) * px_scale   (reuses the `scale` vregs)
    rate_ref[...] = (jnp.exp(ll_ref[...]) * scale).astype(out_dtype)


# ---------------------------------------------------------------------------
# Parameter preparation (hoisted out of the per-call path)
# ---------------------------------------------------------------------------
def prepare_params(params, compute_dtype=jnp.bfloat16):
    """Cast, pad (gene axis -> multiple of 128) and fuse the head weights once."""
    n_output = params["w_scale"].shape[1]
    n_out_pad = _round_up(n_output, 128)
    pad = n_out_pad - n_output

    def pad_w(w):
        return jnp.pad(w, ((0, 0), (0, pad))) if pad else w

    # Padded scale-head logits get bias -1e30 so they vanish under softmax.
    b_scale = (jnp.pad(params["b_scale"], ((0, 0), (0, pad)),
                       constant_values=-1e30) if pad else params["b_scale"])
    b_r = jnp.pad(params["b_r"], ((0, 0), (0, pad))) if pad else params["b_r"]
    b_drop = (jnp.pad(params["b_drop"], ((0, 0), (0, pad)))
              if pad else params["b_drop"])

    w_heads = jnp.concatenate(
        [pad_w(params["w_scale"]), pad_w(params["w_r"]), pad_w(params["w_drop"])],
        axis=1).astype(compute_dtype)
    b_heads = jnp.concatenate([b_scale, b_r, b_drop], axis=1).astype(jnp.float32)

    return {
        "w1": params["w1"].astype(compute_dtype),
        "b1": params["b1"].astype(jnp.float32),
        "w_heads": w_heads,
        "b_heads": b_heads,
        "n_output": int(n_output),
        "n_out_pad": int(n_out_pad),
    }


# ---------------------------------------------------------------------------
# Wrapper
# ---------------------------------------------------------------------------
def decoder_scvi_forward(z, log_library, params=None, *, prepared=None,
                         tile_b=None, compute_dtype=jnp.bfloat16,
                         out_dtype=jnp.float32, dispersion="gene-cell"):
    """Fused DecoderSCVI forward. Returns (px_scale, px_r, px_rate, px_dropout)."""
    if prepared is None:
        if params is None:
            raise ValueError("need `params` or `prepared`")
        prepared = prepare_params(params, compute_dtype)

    B, n_input = z.shape
    w1, b1 = prepared["w1"], prepared["b1"]
    wh, bh = prepared["w_heads"], prepared["b_heads"]
    n_hidden = w1.shape[1]
    n_output = prepared["n_output"]
    n_out_pad = prepared["n_out_pad"]
    compute_dtype = w1.dtype

    zc = z.astype(compute_dtype)
    ll = log_library.astype(jnp.float32)

    # --- batch tile selection -------------------------------------------------
    # bf16 packs 16 sublanes per vreg -> round bf16 tiles to 16.
    align = 16 if jnp.dtype(compute_dtype) == jnp.dtype(jnp.bfloat16) else 8
    if tile_b is None:
        # Larger tiles on 128 MiB parts when the gene row is modest; always try
        # to get >= 2 grid steps so v7x's two TensorCores both receive work.
        big = 512 if n_out_pad <= 4096 else 256
        if B >= 2 * big:
            tile_b = big
        elif B >= 2 * align:
            tile_b = _round_up(max(pl.cdiv(B, 2), align), align)
        else:
            tile_b = _round_up(max(B, 1), align)
    tile_b = max(align, _round_up(tile_b, align))
    b_pad = _round_up(B, tile_b)
    if b_pad != B:
        zc = jnp.pad(zc, ((0, b_pad - B), (0, 0)))
        ll = jnp.pad(ll, ((0, b_pad - B), (0, 0)))
    grid = (b_pad // tile_b,)

    # --- cost hint for XLA's scheduler ---------------------------------------
    out_item = jnp.dtype(out_dtype).itemsize
    w_bytes = (w1.size * w1.dtype.itemsize + wh.size * wh.dtype.itemsize
               + (b1.size + bh.size) * 4)
    in_bytes = zc.size * zc.dtype.itemsize + ll.size * 4
    out_bytes = 4 * b_pad * n_out_pad * out_item
    cost = pl.CostEstimate(
        flops=2 * b_pad * (n_input * n_hidden + 3 * n_hidden * n_out_pad),
        transcendentals=b_pad * (n_out_pad + 1),
        bytes_accessed=w_bytes + in_bytes + out_bytes,
    )

    # --- generation-aware VMEM budget -----------------------------------------
    tile_io = 2 * (tile_b * n_input * zc.dtype.itemsize
                   + tile_b * 4
                   + 4 * tile_b * n_out_pad * out_item)
    interm = tile_b * (n_hidden + 2 * n_out_pad) * 4
    need = 2 * w_bytes + tile_io + interm
    try:
        cap = int(0.8 * pltpu.get_tpu_info().vmem_capacity_bytes)
    except Exception:
        cap = 48 * 2 ** 20          # conservative: fits v7x's 64 MiB physical VMEM
    vmem_limit = int(min(max(need + need // 2, 32 * 2 ** 20), cap))

    # --- pallas_call -----------------------------------------------------------
    def const_spec(shape):
        # Constant index_map: Pallas keeps the block resident / skips re-DMA.
        return pl.BlockSpec(shape, lambda i: (0, 0))

    in_specs = [
        pl.BlockSpec((tile_b, n_input), lambda i: (i, 0)),   # z
        pl.BlockSpec((tile_b, 1), lambda i: (i, 0)),         # log_library
        const_spec((n_input, n_hidden)),                     # w1
        const_spec((1, n_hidden)),                           # b1
        const_spec((n_hidden, 3 * n_out_pad)),               # fused head W
        const_spec((1, 3 * n_out_pad)),                      # fused head b
    ]
    out_spec = pl.BlockSpec((tile_b, n_out_pad), lambda i: (i, 0))
    out_shape = tuple(jax.ShapeDtypeStruct((b_pad, n_out_pad), out_dtype)
                      for _ in range(4))

    outs = pl.pallas_call(
        decoder_scvi_kernel,
        out_shape=out_shape,
        grid_spec=pltpu.PrefetchScalarGridSpec(
            num_scalar_prefetch=0,
            grid=grid,
            in_specs=in_specs,
            out_specs=[out_spec] * 4,
        ),
        compiler_params=pltpu.CompilerParams(
            dimension_semantics=("parallel",),   # B tiles are independent
            vmem_limit_bytes=vmem_limit,
        ),
        cost_estimate=cost,
    )(zc, ll, w1, b1, wh, bh)

    if b_pad != B or n_out_pad != n_output:
        outs = tuple(o[:B, :n_output] for o in outs)

    px_scale, px_r, px_rate, px_dropout = outs
    if dispersion != "gene-cell":
        px_r = None     # matches the torch module's behaviour
    # TODO(synk): use_poisson=True path (px_r = px_dropout = None) not needed
    # for the default config.
    return px_scale, px_r, px_rate, px_dropout


# ---------------------------------------------------------------------------
# Synthetic params + pure-JAX reference
# ---------------------------------------------------------------------------
def init_params(key, n_input, n_hidden, n_output):
    """Deterministic synthetic parameter init (shapes follow DecoderSCVI.__init__)."""
    ks = jax.random.split(key, 8)
    s_in = 1.0 / jnp.sqrt(jnp.float32(n_input))
    s_h = 1.0 / jnp.sqrt(jnp.float32(n_hidden))
    u = jax.random.uniform
    return {
        "w1":      u(ks[0], (n_input, n_hidden), jnp.float32, -s_in, s_in),
        "b1":      u(ks[1], (1, n_hidden), jnp.float32, -s_in, s_in),
        "w_scale": u(ks[2], (n_hidden, n_output), jnp.float32, -s_h, s_h),
        "b_scale": u(ks[3], (1, n_output), jnp.float32, -s_h, s_h),
        "w_r":     u(ks[4], (n_hidden, n_output), jnp.float32, -s_h, s_h),
        "b_r":     u(ks[5], (1, n_output), jnp.float32, -s_h, s_h),
        "w_drop":  u(ks[6], (n_hidden, n_output), jnp.float32, -s_h, s_h),
        "b_drop":  u(ks[7], (1, n_output), jnp.float32, -s_h, s_h),
    }


def reference_forward(z, log_library, p, compute_dtype=jnp.float32):
    """Pure-JAX reference with the same dtype handling as the kernel."""
    cd = compute_dtype
    px = jnp.dot(z.astype(cd), p["w1"].astype(cd),
                 preferred_element_type=jnp.float32) + p["b1"]
    px = jnp.maximum(px, 0.0).astype(cd)

    def head(w, b):
        return jnp.dot(px, w.astype(cd), preferred_element_type=jnp.float32) + b

    logits = head(p["w_scale"], p["b_scale"])
    r = head(p["w_r"], p["b_r"])
    drop = head(p["w_drop"], p["b_drop"])
    scale = jax.nn.softmax(logits, axis=-1)
    rate = jnp.exp(log_library) * scale
    return scale, r, rate, drop


# ---------------------------------------------------------------------------
# Demo / self-test
# ---------------------------------------------------------------------------
if __name__ == "__main__":
    key = jax.random.PRNGKey(0)

    # (B, n_input, n_hidden, n_output, tile_b, compute_dtype, out_dtype, rtol, atol)
    configs = [
        (8,  16, 128, 256, None, jnp.float32,  jnp.float32, 1e-2, 1e-3),  # single tile, f32
        (96, 16, 128, 200, 32,   jnp.bfloat16, jnp.float32, 1e-2, 1e-3),  # padded gene axis
        (64, 16, 128, 256, None, jnp.bfloat16, jnp.bfloat16, 2e-2, 2e-3), # bf16 out, 2 tiles
    ]

    for idx, (B, n_in, n_hid, n_out, tb, cdt, odt, rtol, atol) in enumerate(configs):
        k_z, k_ll, k_p = jax.random.split(jax.random.fold_in(key, idx), 3)
        z = jax.random.normal(k_z, (B, n_in), jnp.float32)
        log_library = jax.random.normal(k_ll, (B, 1), jnp.float32)
        # batch_index is in the torch signature but unused when n_batch=1.
        batch_index = jnp.zeros((B, 1), jnp.int32)  # noqa: F841
        params = init_params(k_p, n_in, n_hid, n_out)

        prepared = prepare_params(params, compute_dtype=cdt)   # hoisted fuse/cast/pad
        outs = decoder_scvi_forward(z, log_library, prepared=prepared,
                                    tile_b=tb, compute_dtype=cdt, out_dtype=odt)
        outs = jax.block_until_ready(outs)
        refs = reference_forward(z, log_library, params, compute_dtype=cdt)

        for name, got, want in zip(("scale", "r", "rate", "dropout"), outs, refs):
            assert got is not None
            assert got.shape == want.shape, (
                f"shape mismatch (config {idx}, {name}): {got.shape} vs {want.shape}")
            assert got.dtype == jnp.dtype(odt), f"dtype mismatch (config {idx}, {name})"
            ok = jnp.allclose(got.astype(jnp.float32), want, rtol=rtol, atol=atol)
            assert bool(ok), f"mismatch vs reference (config {idx}, {name})"

    print("KERNEL_OK")
</pallas_src>

<mosaic_0001>
module attributes {stable_mosaic.version = 11 : i64} {
  func.func @decoder_scvi_kernel(%arg0: i32, %arg1: memref<8x16xf32, #tpu.memory_space<vmem>>, %arg2: memref<8x1xf32, #tpu.memory_space<vmem>>, %arg3: memref<16x128xf32, #tpu.memory_space<vmem>>, %arg4: memref<1x128xf32, #tpu.memory_space<vmem>>, %arg5: memref<128x768xf32, #tpu.memory_space<vmem>>, %arg6: memref<1x768xf32, #tpu.memory_space<vmem>>, %arg7: memref<8x256xf32, #tpu.memory_space<vmem>>, %arg8: memref<8x256xf32, #tpu.memory_space<vmem>>, %arg9: memref<8x256xf32, #tpu.memory_space<vmem>>, %arg10: memref<8x256xf32, #tpu.memory_space<vmem>>) attributes {dimension_semantics = [#tpu.dimension_semantics<parallel>], iteration_bounds = array<i64: 1>, scalar_prefetch = 0 : i64, scratch_operands = 0 : i64, tpu.core_type = #tpu.core_type<tc>, window_params = [{transform_indices = @transform_0, window_bounds = array<i64: 8, 16>}, {transform_indices = @transform_1, window_bounds = array<i64: 8, 1>}, {pipeline_mode = #tpu.pipeline_mode<synchronous>, transform_indices = @transform_2, window_bounds = array<i64: 16, 128>}, {pipeline_mode = #tpu.pipeline_mode<synchronous>, transform_indices = @transform_3, window_bounds = array<i64: 1, 128>}, {pipeline_mode = #tpu.pipeline_mode<synchronous>, transform_indices = @transform_4, window_bounds = array<i64: 128, 768>}, {pipeline_mode = #tpu.pipeline_mode<synchronous>, transform_indices = @transform_5, window_bounds = array<i64: 1, 768>}, {transform_indices = @transform_6, window_bounds = array<i64: 8, 256>}, {transform_indices = @transform_7, window_bounds = array<i64: 8, 256>}, {transform_indices = @transform_8, window_bounds = array<i64: 8, 256>}, {transform_indices = @transform_9, window_bounds = array<i64: 8, 256>}]} {
    %c0 = arith.constant 0 : index
    %c0_0 = arith.constant 0 : index
    %0 = vector.load %arg1[%c0, %c0_0] : memref<8x16xf32, #tpu.memory_space<vmem>>, vector<8x16xf32>
    %c0_1 = arith.constant 0 : index
    %c0_2 = arith.constant 0 : index
    %1 = vector.load %arg3[%c0_1, %c0_2] : memref<16x128xf32, #tpu.memory_space<vmem>>, vector<16x128xf32>
    %cst = arith.constant dense<0.000000e+00> : vector<8x128xf32>
    %2 = tpu.matmul %0, %1, %cst {dimension_numbers = #tpu.dot_dimension_numbers<[1], [0], [0], [1], [0, 0, 1, 1], [], []>} : vector<8x16xf32>, vector<16x128xf32>, vector<8x128xf32> -> vector<8x128xf32>
    %c0_3 = arith.constant 0 : index
    %c0_4 = arith.constant 0 : index
    %3 = vector.load %arg4[%c0_3, %c0_4] : memref<1x128xf32, #tpu.memory_space<vmem>>, vector<1x128xf32>
    %4 = vector.broadcast %3 : vector<1x128xf32> to vector<8x128xf32>
    %5 = arith.addf %2, %4 : vector<8x128xf32>
    %cst_5 = arith.constant 0.000000e+00 : f32
    %6 = vector.broadcast %cst_5 : f32 to vector<8x128xf32>
    %7 = arith.maximumf %5, %6 : vector<8x128xf32>
    %c0_6 = arith.constant 0 : index
    %c256 = arith.constant 256 : index
    %8 = vector.load %arg5[%c0_6, %c256] : memref<128x768xf32, #tpu.memory_space<vmem>>, vector<128x256xf32>
    %c0_7 = arith.constant 0 : index
    %c256_8 = arith.constant 256 : index
    %9 = vector.load %arg6[%c0_7, %c256_8] : memref<1x768xf32, #tpu.memory_space<vmem>>, vector<1x256xf32>
    %cst_9 = arith.constant dense<0.000000e+00> : vector<8x256xf32>
    %10 = tpu.matmul %7, %8, %cst_9 {dimension_numbers = #tpu.dot_dimension_numbers<[1], [0], [0], [1], [0, 0, 1, 1], [], []>} : vector<8x128xf32>, vector<128x256xf32>, vector<8x256xf32> -> vector<8x256xf32>
    %11 = vector.broadcast %9 : vector<1x256xf32> to vector<8x256xf32>
    %12 = arith.addf %10, %11 : vector<8x256xf32>
    %c0_10 = arith.constant 0 : index
    %c0_11 = arith.constant 0 : index
    %13 = vector.load %arg8[%c0_10, %c0_11] : memref<8x256xf32, #tpu.memory_space<vmem>>, vector<8x256xf32>
    tpu.vector_store %arg8[%c0_10, %c0_11], %12 {strides = array<i32>} : memref<8x256xf32, #tpu.memory_space<vmem>>, vector<8x256xf32>,
    %c0_12 = arith.constant 0 : index
    %c512 = arith.constant 512 : index
    %14 = vector.load %arg5[%c0_12, %c512] : memref<128x768xf32, #tpu.memory_space<vmem>>, vector<128x256xf32>
    %c0_13 = arith.constant 0 : index
    %c512_14 = arith.constant 512 : index
    %15 = vector.load %arg6[%c0_13, %c512_14] : memref<1x768xf32, #tpu.memory_space<vmem>>, vector<1x256xf32>
    %cst_15 = arith.constant dense<0.000000e+00> : vector<8x256xf32>
    %16 = tpu.matmul %7, %14, %cst_15 {dimension_numbers = #tpu.dot_dimension_numbers<[1], [0], [0], [1], [0, 0, 1, 1], [], []>} : vector<8x128xf32>, vector<128x256xf32>, vector<8x256xf32> -> vector<8x256xf32>
    %17 = vector.broadcast %15 : vector<1x256xf32> to vector<8x256xf32>
    %18 = arith.addf %16, %17 : vector<8x256xf32>
    %c0_16 = arith.constant 0 : index
    %c0_17 = arith.constant 0 : index
    %19 = vector.load %arg10[%c0_16, %c0_17] : memref<8x256xf32, #tpu.memory_space<vmem>>, vector<8x256xf32>
    tpu.vector_store %arg10[%c0_16, %c0_17], %18 {strides = array<i32>} : memref<8x256xf32, #tpu.memory_space<vmem>>, vector<8x256xf32>,
    %c0_18 = arith.constant 0 : index
    %c0_19 = arith.constant 0 : index
    %20 = vector.load %arg5[%c0_18, %c0_19] : memref<128x768xf32, #tpu.memory_space<vmem>>, vector<128x256xf32>
    %c0_20 = arith.constant 0 : index
    %c0_21 = arith.constant 0 : index
    %21 = vector.load %arg6[%c0_20, %c0_21] : memref<1x768xf32, #tpu.memory_space<vmem>>, vector<1x256xf32>
    %cst_22 = arith.constant dense<0.000000e+00> : vector<8x256xf32>
    %22 = tpu.matmul %7, %20, %cst_22 {dimension_numbers = #tpu.dot_dimension_numbers<[1], [0], [0], [1], [0, 0, 1, 1], [], []>} : vector<8x128xf32>, vector<128x256xf32>, vector<8x256xf32> -> vector<8x256xf32>
    %23 = vector.broadcast %21 : vector<1x256xf32> to vector<8x256xf32>
    %24 = arith.addf %22, %23 : vector<8x256xf32>
    %cst_23 = arith.constant dense<0xFF800000> : vector<8xf32>
    %25 = vector.multi_reduction <maximumf>, %24, %cst_23 [1] : vector<8x256xf32> to vector<8xf32>
    %26 = vector.shape_cast %25 : vector<8xf32> to vector<8x1xf32>
    %27 = vector.broadcast %26 : vector<8x1xf32> to vector<8x256xf32>
    %28 = arith.subf %24, %27 : vector<8x256xf32>
    %29 = math.exp %28 : vector<8x256xf32>
    %cst_24 = arith.constant dense<0.000000e+00> : vector<8xf32>
    %30 = vector.multi_reduction <add>, %29, %cst_24 [1] : vector<8x256xf32> to vector<8xf32>
    %31 = vector.shape_cast %30 : vector<8xf32> to vector<8x1xf32>
    %32 = vector.broadcast %31 : vector<8x1xf32> to vector<8x256xf32>
    %33 = arith.divf %29, %32 : vector<8x256xf32>
    %c0_25 = arith.constant 0 : index
    %c0_26 = arith.constant 0 : index
    %34 = vector.load %arg7[%c0_25, %c0_26] : memref<8x256xf32, #tpu.memory_space<vmem>>, vector<8x256xf32>
    tpu.vector_store %arg7[%c0_25, %c0_26], %33 {strides = array<i32>} : memref<8x256xf32, #tpu.memory_space<vmem>>, vector<8x256xf32>,
    %c0_27 = arith.constant 0 : index
    %c0_28 = arith.constant 0 : index
    %35 = vector.load %arg2[%c0_27, %c0_28] : memref<8x1xf32, #tpu.memory_space<vmem>>, vector<8x1xf32>
    %36 = math.exp %35 : vector<8x1xf32>
    %37 = vector.broadcast %36 : vector<8x1xf32> to vector<8x256xf32>
    %38 = arith.mulf %37, %33 : vector<8x256xf32>
    %c0_29 = arith.constant 0 : index
    %c0_30 = arith.constant 0 : index
    %39 = vector.load %arg9[%c0_29, %c0_30] : memref<8x256xf32, #tpu.memory_space<vmem>>, vector<8x256xf32>
    tpu.vector_store %arg9[%c0_29, %c0_30], %38 {strides = array<i32>} : memref<8x256xf32, #tpu.memory_space<vmem>>, vector<8x256xf32>,
    return
  }
  func.func @transform_0(%arg0: i32) -> (i32, i32) {
    %c0_i32 = arith.constant 0 : i32
    %c0_i32_0 = arith.constant 0 : i32
    return %arg0, %c0_i32 : i32, i32
  }
  func.func @transform_1(%arg0: i32) -> (i32, i32) {
    %c0_i32 = arith.constant 0 : i32
    %c0_i32_0 = arith.constant 0 : i32
    return %arg0, %c0_i32 : i32, i32
  }
  func.func @transform_2(%arg0: i32) -> (i32, i32) {
    %c0_i32 = arith.constant 0 : i32
    %c0_i32_0 = arith.constant 0 : i32
    %c0_i32_1 = arith.constant 0 : i32
    return %c0_i32, %c0_i32_0 : i32, i32
  }
  func.func @transform_3(%arg0: i32) -> (i32, i32) {
    %c0_i32 = arith.constant 0 : i32
    %c0_i32_0 = arith.constant 0 : i32
    %c0_i32_1 = arith.constant 0 : i32
    return %c0_i32, %c0_i32_0 : i32, i32
  }
  func.func @transform_4(%arg0: i32) -> (i32, i32) {
    %c0_i32 = arith.constant 0 : i32
    %c0_i32_0 = arith.constant 0 : i32
    %c0_i32_1 = arith.constant 0 : i32
    return %c0_i32, %c0_i32_0 : i32, i32
  }
  func.func @transform_5(%arg0: i32) -> (i32, i32) {
    %c0_i32 = arith.constant 0 : i32
    %c0_i32_0 = arith.constant 0 : i32
    %c0_i32_1 = arith.constant 0 : i32
    return %c0_i32, %c0_i32_0 : i32, i32
  }
  func.func @transform_6(%arg0: i32) -> (i32, i32) {
    %c0_i32 = arith.constant 0 : i32
    %c0_i32_0 = arith.constant 0 : i32
    return %arg0, %c0_i32 : i32, i32
  }
  func.func @transform_7(%arg0: i32) -> (i32, i32) {
    %c0_i32 = arith.constant 0 : i32
    %c0_i32_0 = arith.constant 0 : i32
    return %arg0, %c0_i32 : i32, i32
  }
  func.func @transform_8(%arg0: i32) -> (i32, i32) {
    %c0_i32 = arith.constant 0 : i32
    %c0_i32_0 = arith.constant 0 : i32
    return %arg0, %c0_i32 : i32, i32
  }
  func.func @transform_9(%arg0: i32) -> (i32, i32) {
    %c0_i32 = arith.constant 0 : i32
    %c0_i32_0 = arith.constant 0 : i32
    return %arg0, %c0_i32 : i32, i32
  }
}

</mosaic_0001>

<llo_original>
// kernel: tpu_custom_call.1
$region0: #{tpu_custom_call.1}
  #allocation0 [shape = 'u32[]', space=smem, size = 0x4, offset = 0x4, fixed_abs, tag = 'smem constant byte address 0x4 - core index']
  #allocation1 [shape = 'u32[144,128]{1,0:T(1,128)}', space=vmem, size = 0x12000, scoped, tag = 'internal scratch']
  %s0 = inlined_call_operand.hbm [shape: f32[8,16], index: 0, kind: input, shape index: {}]
  %s1 = inlined_call_operand.vmem [shape: f32[8,1], index: 1, kind: input, shape index: {}]
  %s2 = inlined_call_operand.vmem [shape: f32[16,128], index: 2, kind: input, shape index: {}]
  %s3 = inlined_call_operand.vmem [shape: f32[1,128], index: 3, kind: input, shape index: {}]
  %s4 = inlined_call_operand.hbm [shape: f32[128,768], index: 4, kind: input, shape index: {}]
  %s5 = inlined_call_operand.vmem [shape: f32[1,768], index: 5, kind: input, shape index: {}]
  %s6 = inlined_call_operand.hbm [shape: f32[8,256], index: 6, kind: output, shape index: {0}]
  %s7 = inlined_call_operand.hbm [shape: f32[8,256], index: 7, kind: output, shape index: {1}]
  %s8 = inlined_call_operand.hbm [shape: f32[8,256], index: 8, kind: output, shape index: {2}]
  %s9 = inlined_call_operand.hbm [shape: f32[8,256], index: 9, kind: output, shape index: {3}]
  %10 = xla_tuple %s6, %s7, %s8, %s9
  %s11 = sld [smem:[#allocation0]]
  $region66: #{tpu_custom_call.1} parent=0
    _
  %s13 = ssub.s32 1, %s11
  %s14 = scalar_select 0, %s13, %s11
  $region1: #{tpu_custom_call.1} parent=0
    #allocation2 [shape = 'u8[4096]{0}', space=vmem, size = 0x1000, scoped, tag = 'input window, operand 0, single buffered']
    #allocation3 [shape = 's32[1]{0}', space=sflag, size = 0x4, scoped, tag = 'scoped memory for tpu_custom_call.1']
    #allocation4 [shape = 's32[1]{0}', space=sflag, size = 0x4, scoped, tag = 'scoped memory for tpu_custom_call.1']
    #allocation5 [shape = 'u8[393216]{0}', space=vmem, size = 0x60000, scoped, tag = 'input window, operand 4, single buffered']
    #allocation6 [shape = 's32[1]{0}', space=sflag, size = 0x4, scoped, tag = 'scoped memory for tpu_custom_call.1']
    #allocation7 [shape = 'u8[8192]{0}', space=vmem, size = 0x2000, scoped, tag = 'output window, operand 0, single buffered']
    #allocation8 [shape = 'u8[8192]{0}', space=vmem, size = 0x2000, scoped, tag = 'output window, operand 1, single buffered']
    #allocation9 [shape = 's32[1]{0}', space=sflag, size = 0x4, scoped, tag = 'scoped memory for tpu_custom_call.1']
    #allocation10 [shape = 'u8[8192]{0}', space=vmem, size = 0x2000, scoped, tag = 'output window, operand 2, single buffered']
    #allocation11 [shape = 'u8[8192]{0}', space=vmem, size = 0x2000, scoped, tag = 'output window, operand 3, single buffered']
    #allocation12 [shape = 's32[1]{0}', space=sflag, size = 0x4, scoped, tag = 'scoped memory for tpu_custom_call.1']
    %15 = vsyncpa [#allocation3], 0
    %16 = vsyncpa [#allocation6], 0
    %17 = vsyncpa [#allocation4], 0
    %18 = vsyncpa [#allocation9], 0
    %19 = vsyncpa [#allocation12], 0
    // Predicated region
    $region2: #{tpu_custom_call.1} parent=1 // pred_check
      _
    $region3: #{tpu_custom_call.1} parent=1 // pred_check_branch
      %21 = sbr.rel (0) target = $region5
    $region4: #{tpu_custom_call.1} parent=1 // pred_region
      %s23 = ssub.s32 128, 128
      %24 = vsyncadd [#allocation3], %s23
      %s26 = sshll.u32 [#allocation2], 4
      %s27 = int_to_ptr.vmem [resolvable:$true] %s26
      %29 = dma.hbm_to_vmem [thread:$0]  %s0, 128, %s27, [#allocation3]
    $region5: #{tpu_custom_call.1} parent=1 // pred_fallthru
      _
    // Predicated region
    $region6: #{tpu_custom_call.1} parent=1 // pred_check
      _
    $region7: #{tpu_custom_call.1} parent=1 // pred_check_branch
      %31 = sbr.rel (0) target = $region9
    $region8: #{tpu_custom_call.1} parent=1 // pred_region
      _
    $region9: #{tpu_custom_call.1} parent=1 // pred_fallthru
      _
    // Predicated region
    $region10: #{tpu_custom_call.1} parent=1 // pred_check
      _
    $region11: #{tpu_custom_call.1} parent=1 // pred_check_branch
      %33 = sbr.rel (0) target = $region13
    $region12: #{tpu_custom_call.1} parent=1 // pred_region
      _
    $region13: #{tpu_custom_call.1} parent=1 // pred_fallthru
      _
    // Predicated region
    $region14: #{tpu_custom_call.1} parent=1 // pred_check
      _
    $region15: #{tpu_custom_call.1} parent=1 // pred_check_branch
      %35 = sbr.rel (0) target = $region17
    $region16: #{tpu_custom_call.1} parent=1 // pred_region
      _
    $region17: #{tpu_custom_call.1} parent=1 // pred_fallthru
      _
    // Predicated region
    $region18: #{tpu_custom_call.1} parent=1 // pred_check
      _
    $region19: #{tpu_custom_call.1} parent=1 // pred_check_branch
      %37 = sbr.rel (0) target = $region21
    $region20: #{tpu_custom_call.1} parent=1 // pred_region
      %s39 = ssub.s32 12288, 12288
      %40 = vsyncadd [#allocation6], %s39
      %s41 = sshll.u32 [#allocation5], 4
      %s42 = int_to_ptr.vmem [resolvable:$true] %s41
      %47 = dma.hbm_to_vmem [thread:$0]  %s4, 12288, %s42, [#allocation6], 768, 768, 48
    $region21: #{tpu_custom_call.1} parent=1 // pred_fallthru
      _
    // Predicated region
    $region22: #{tpu_custom_call.1} parent=1 // pred_check
      _
    $region23: #{tpu_custom_call.1} parent=1 // pred_check_branch
      %49 = sbr.rel (0) target = $region25
    $region24: #{tpu_custom_call.1} parent=1 // pred_region
      _
    $region25: #{tpu_custom_call.1} parent=1 // pred_fallthru
      _
    // Predicated region
    $region26: #{tpu_custom_call.1} parent=1 // pred_check
      _
    $region27: #{tpu_custom_call.1} parent=1 // pred_check_branch
      %51 = sbr.rel (0) target = $region29
    $region28: #{tpu_custom_call.1} parent=1 // pred_region
      %52 = dma.done [#allocation3], 128
    $region29: #{tpu_custom_call.1} parent=1 // pred_fallthru
      _
    // Predicated region
    $region30: #{tpu_custom_call.1} parent=1 // pred_check
      _
    $region31: #{tpu_custom_call.1} parent=1 // pred_check_branch
      %54 = sbr.rel (0) target = $region33
    $region32: #{tpu_custom_call.1} parent=1 // pred_region
      %55 = dma.done [#allocation6], 12288
    $region33: #{tpu_custom_call.1} parent=1 // pred_fallthru
      _
    %v56 = vld [vmem:[#allocation2] sm:$0xff]
    %v57 = vld [vmem:[%s2] sm:$0xff]
    %v58 = vld [vmem:[%s2 + $0x8] sm:$0xff]
    %v59 = vld [vmem:[%s3] sm:$0x1]
    %v61 = vlaneseq
    %v62 = vshrl.u32 %v61, 7
    %v63 = vsub.s32 0, %v62
    %v64 = vrot.slane %v59, %v63
    %vm66 = vcmask 130048
    %v68 = vsel %vm66, %v56, 0
    %70 = vmatprep.subr.mxu0 0.0
    %71 = vmatpush1.msra.mxu0 %v57
    %72 = vmatprep.subr.mxu0 0.0
    %73 = vmatpush1.msra.mxu0 %v58
    %74 = vmatprep.subr.mxu0 0.0
    %75 = vmatpush1.msra.mxu0 0.0
    %76 = vmatprep.subr.mxu0 0.0
    %77 = vmatpush1.msra.mxu0 0.0
    %78 = vmatprep.subr.mxu0 0.0
    %79 = vmatpush1.msra.mxu0 0.0
    %80 = vmatprep.subr.mxu0 0.0
    %81 = vmatpush1.msra.mxu0 0.0
    %82 = vmatprep.subr.mxu0 0.0
    %83 = vmatpush1.msra.mxu0 0.0
    %84 = vmatprep.subr.mxu0 0.0
    %85 = vmatpush1.msra.mxu0 0.0
    %86 = vmatprep.subr.mxu0 0.0
    %87 = vmatpush1.msra.mxu0 0.0
    %88 = vmatprep.subr.mxu0 0.0
    %89 = vmatpush1.msra.mxu0 0.0
    %90 = vmatprep.subr.mxu0 0.0
    %91 = vmatpush1.msra.mxu0 0.0
    %92 = vmatprep.subr.mxu0 0.0
    %93 = vmatpush1.msra.mxu0 0.0
    %94 = vmatprep.subr.mxu0 0.0
    %95 = vmatpush1.msra.mxu0 0.0
    %96 = vmatprep.subr.mxu0 0.0
    %97 = vmatpush1.msra.mxu0 0.0
    %98 = vmatprep.subr.mxu0 0.0
    %99 = vmatpush1.msra.mxu0 0.0
    %100 = vmatprep.subr.mxu0 0.0
    %101 = vmatpush1.msra.mxu0 0.0
    %102 = vmatprep.subr.mxu0 0.0
    %103 = vmatpush1.msra.mxu0 0.0
    %104 = vmatprep.subr.mxu0 0.0
    %105 = vmatpush1.msra.mxu0 0.0
    %106 = vmatprep.subr.mxu0 0.0
    %107 = vmatpush1.msra.mxu0 0.0
    %108 = vmatprep.subr.mxu0 0.0
    %109 = vmatpush1.msra.mxu0 0.0
    %110 = vmatprep.subr.mxu0 0.0
    %111 = vmatpush1.msra.mxu0 0.0
    %112 = vmatprep.subr.mxu0 0.0
    %113 = vmatpush1.msra.mxu0 0.0
    %114 = vmatprep.subr.mxu0 0.0
    %115 = vmatpush1.msra.mxu0 0.0
    %116 = vmatprep.subr.mxu0 0.0
    %117 = vmatpush1.msra.mxu0 0.0
    %118 = vmatprep.subr.mxu0 0.0
    %119 = vmatpush1.msra.mxu0 0.0
    %120 = vmatprep.subr.mxu0 0.0
    %121 = vmatpush1.msra.mxu0 0.0
    %122 = vmatprep.subr.mxu0 0.0
    %123 = vmatpush1.msra.mxu0 0.0
    %124 = vmatprep.subr.mxu0 0.0
    %125 = vmatpush1.msra.mxu0 0.0
    %126 = vmatprep.subr.mxu0 0.0
    %127 = vmatpush1.msra.mxu0 0.0
    %128 = vmatprep.subr.mxu0 0.0
    %129 = vmatpush1.msra.mxu0 0.0
    %130 = vmatprep.subr.mxu0 0.0
    %131 = vmatpush1.msra.mxu0 0.0
    %132 = vmatprep.subr.mxu0 0.0
    %133 = vmatpush1.msra.mxu0 0.0
    %134 = vmatprep.mubr.f32.mxu0 0.0
    %135 = vmatmul.mubr.f32.gmra.mrb[0].mxu0 %v68
    %v136 = vpop.f32.mrb[0].mxu0
    %v137 = vadd.f32 %v64, %v136
    %v138 = vpop.f32.mrb[0].mxu0
    %139 = vdwg.mxu0
    %v140 = vmax.f32 %v137, 0.0
    %v141 = vld [vmem:[#allocation5 + $0x10] sm:$0xff]
    %v142 = vld [vmem:[#allocation5 + $0x18] sm:$0xff]
    %v143 = vld [vmem:[#allocation5 + $0x40] sm:$0xff]
    %v144 = vld [vmem:[#allocation5 + $0x48] sm:$0xff]
    %v145 = vld [vmem:[#allocation5 + $0x70] sm:$0xff]
    %v146 = vld [vmem:[#allocation5 + $0x78] sm:$0xff]
    %v147 = vld [vmem:[#allocation5 + $0xa0] sm:$0xff]
    %v148 = vld [vmem:[#allocation5 + $0xa8] sm:$0xff]
    %v149 = vld [vmem:[#allocation5 + $0xd0] sm:$0xff]
    %v150 = vld [vmem:[#allocation5 + $0xd8] sm:$0xff]
    %v151 = vld [vmem:[#allocation5 + $0x100] sm:$0xff]
    %v152 = vld [vmem:[#allocation5 + $0x108] sm:$0xff]
    %v153 = vld [vmem:[#allocation5 + $0x130] sm:$0xff]
    %v154 = vld [vmem:[#allocation5 + $0x138] sm:$0xff]
    %v155 = vld [vmem:[#allocation5 + $0x160] sm:$0xff]
    %v156 = vld [vmem:[#allocation5 + $0x168] sm:$0xff]
    %v157 = vld [vmem:[#allocation5 + $0x190] sm:$0xff]
    %v158 = vld [vmem:[#allocation5 + $0x198] sm:$0xff]
    %v159 = vld [vmem:[#allocation5 + $0x1c0] sm:$0xff]
    %v160 = vld [vmem:[#allocation5 + $0x1c8] sm:$0xff]
    %v161 = vld [vmem:[#allocation5 + $0x1f0] sm:$0xff]
    %v162 = vld [vmem:[#allocation5 + $0x1f8] sm:$0xff]
    %v163 = vld [vmem:[#allocation5 + $0x220] sm:$0xff]
    %v164 = vld [vmem:[#allocation5 + $0x228] sm:$0xff]
    %v165 = vld [vmem:[#allocation5 + $0x250] sm:$0xff]
    %v166 = vld [vmem:[#allocation5 + $0x258] sm:$0xff]
    %v167 = vld [vmem:[#allocation5 + $0x280] sm:$0xff]
    %v168 = vld [vmem:[#allocation5 + $0x288] sm:$0xff]
    %v169 = vld [vmem:[#allocation5 + $0x2b0] sm:$0xff]
    %v170 = vld [vmem:[#allocation5 + $0x2b8] sm:$0xff]
    %v171 = vld [vmem:[#allocation5 + $0x2e0] sm:$0xff]
    %v172 = vld [vmem:[#allocation5 + $0x2e8] sm:$0xff]
    %v173 = vld [vmem:[%s5 + $0x2] sm:$0x3]
    %v175 = vlaneseq
    %v176 = vshrl.u32 %v175, 7
    %v177 = vsub.s32 0, %v176
    %v178 = vrot.slane %v173, %v177
    %v179 = vlaneseq
    %v180 = vshrl.u32 %v179, 7
    %v181 = vsub.s32 1, %v180
    %v182 = vrot.slane %v173, %v181
    %185 = vmatprep.subr.mxu0 %v142
    %186 = vmatpush1.msra.mxu0 %v141
    %187 = vmatprep.subr.mxu0 %v144
    %188 = vmatpush1.msra.mxu0 %v143
    %189 = vmatprep.subr.mxu0 %v146
    %190 = vmatpush1.msra.mxu0 %v145
    %191 = vmatprep.subr.mxu0 %v148
    %192 = vmatpush1.msra.mxu0 %v147
    %193 = vmatprep.subr.mxu0 %v150
    %194 = vmatpush1.msra.mxu0 %v149
    %195 = vmatprep.subr.mxu0 %v152
    %196 = vmatpush1.msra.mxu0 %v151
    %197 = vmatprep.subr.mxu0 %v154
    %198 = vmatpush1.msra.mxu0 %v153
    %199 = vmatprep.subr.mxu0 %v156
    %200 = vmatpush1.msra.mxu0 %v155
    %201 = vmatprep.subr.mxu0 %v158
    %202 = vmatpush1.msra.mxu0 %v157
    %203 = vmatprep.subr.mxu0 %v160
    %204 = vmatpush1.msra.mxu0 %v159
    %205 = vmatprep.subr.mxu0 %v162
    %206 = vmatpush1.msra.mxu0 %v161
    %207 = vmatprep.subr.mxu0 %v164
    %208 = vmatpush1.msra.mxu0 %v163
    %209 = vmatprep.subr.mxu0 %v166
    %210 = vmatpush1.msra.mxu0 %v165
    %211 = vmatprep.subr.mxu0 %v168
    %212 = vmatpush1.msra.mxu0 %v167
    %213 = vmatprep.subr.mxu0 %v170
    %214 = vmatpush1.msra.mxu0 %v169
    %215 = vmatprep.subr.mxu0 %v172
    %216 = vmatpush1.msra.mxu0 %v171
    %217 = vmatprep.subr.mxu0 0.0
    %218 = vmatpush1.msra.mxu0 0.0
    %219 = vmatprep.subr.mxu0 0.0
    %220 = vmatpush1.msra.mxu0 0.0
    %221 = vmatprep.subr.mxu0 0.0
    %222 = vmatpush1.msra.mxu0 0.0
    %223 = vmatprep.subr.mxu0 0.0
    %224 = vmatpush1.msra.mxu0 0.0
    %225 = vmatprep.subr.mxu0 0.0
    %226 = vmatpush1.msra.mxu0 0.0
    %227 = vmatprep.subr.mxu0 0.0
    %228 = vmatpush1.msra.mxu0 0.0
    %229 = vmatprep.subr.mxu0 0.0
    %230 = vmatpush1.msra.mxu0 0.0
    %231 = vmatprep.subr.mxu0 0.0
    %232 = vmatpush1.msra.mxu0 0.0
    %233 = vmatprep.subr.mxu0 0.0
    %234 = vmatpush1.msra.mxu0 0.0
    %235 = vmatprep.subr.mxu0 0.0
    %236 = vmatpush1.msra.mxu0 0.0
    %237 = vmatprep.subr.mxu0 0.0
    %238 = vmatpush1.msra.mxu0 0.0
    %239 = vmatprep.subr.mxu0 0.0
    %240 = vmatpush1.msra.mxu0 0.0
    %241 = vmatprep.subr.mxu0 0.0
    %242 = vmatpush1.msra.mxu0 0.0
    %243 = vmatprep.subr.mxu0 0.0
    %244 = vmatpush1.msra.mxu0 0.0
    %245 = vmatprep.subr.mxu0 0.0
    %246 = vmatpush1.msra.mxu0 0.0
    %247 = vmatprep.subr.mxu0 0.0
    %248 = vmatpush1.msra.mxu0 0.0
    %249 = vmatprep.mubr.f32.mxu0 0.0
    %250 = vmatmul.mubr.f32.gmra.mrb[0].mxu0 %v140
    %v251 = vpop.f32.mrb[0].mxu0
    %v252 = vadd.f32 %v178, %v251
    %v253 = vpop.f32.mrb[0].mxu0
    %v254 = vadd.f32 %v182, %v253
    %255 = vdwg.mxu0
    %256 = vst [vmem:[#allocation8] sm:$0xff] %v252
    %257 = vst [vmem:[#allocation8 + $0x8] sm:$0xff] %v254
    %v258 = vld [vmem:[#allocation5 + $0x20] sm:$0xff]
    %v259 = vld [vmem:[#allocation5 + $0x28] sm:$0xff]
    %v260 = vld [vmem:[#allocation5 + $0x50] sm:$0xff]
    %v261 = vld [vmem:[#allocation5 + $0x58] sm:$0xff]
    %v262 = vld [vmem:[#allocation5 + $0x80] sm:$0xff]
    %v263 = vld [vmem:[#allocation5 + $0x88] sm:$0xff]
    %v264 = vld [vmem:[#allocation5 + $0xb0] sm:$0xff]
    %v265 = vld [vmem:[#allocation5 + $0xb8] sm:$0xff]
    %v266 = vld [vmem:[#allocation5 + $0xe0] sm:$0xff]
    %v267 = vld [vmem:[#allocation5 + $0xe8] sm:$0xff]
    %v268 = vld [vmem:[#allocation5 + $0x110] sm:$0xff]
    %v269 = vld [vmem:[#allocation5 + $0x118] sm:$0xff]
    %v270 = vld [vmem:[#allocation5 + $0x140] sm:$0xff]
    %v271 = vld [vmem:[#allocation5 + $0x148] sm:$0xff]
    %v272 = vld [vmem:[#allocation5 + $0x170] sm:$0xff]
    %v273 = vld [vmem:[#allocation5 + $0x178] sm:$0xff]
    %v274 = vld [vmem:[#allocation5 + $0x1a0] sm:$0xff]
    %v275 = vld [vmem:[#allocation5 + $0x1a8] sm:$0xff]
    %v276 = vld [vmem:[#allocation5 + $0x1d0] sm:$0xff]
    %v277 = vld [vmem:[#allocation5 + $0x1d8] sm:$0xff]
    %v278 = vld [vmem:[#allocation5 + $0x200] sm:$0xff]
    %v279 = vld [vmem:[#allocation5 + $0x208] sm:$0xff]
    %v280 = vld [vmem:[#allocation5 + $0x230] sm:$0xff]
    %v281 = vld [vmem:[#allocation5 + $0x238] sm:$0xff]
    %v282 = vld [vmem:[#allocation5 + $0x260] sm:$0xff]
    %v283 = vld [vmem:[#allocation5 + $0x268] sm:$0xff]
    %v284 = vld [vmem:[#allocation5 + $0x290] sm:$0xff]
    %v285 = vld [vmem:[#allocation5 + $0x298] sm:$0xff]
    %v286 = vld [vmem:[#allocation5 + $0x2c0] sm:$0xff]
    %v287 = vld [vmem:[#allocation5 + $0x2c8] sm:$0xff]
    %v288 = vld [vmem:[#allocation5 + $0x2f0] sm:$0xff]
    %v289 = vld [vmem:[#allocation5 + $0x2f8] sm:$0xff]
    %v290 = vld [vmem:[%s5 + $0x4] sm:$0x3]
    %v292 = vlaneseq
    %v293 = vshrl.u32 %v292, 7
    %v294 = vsub.s32 0, %v293
    %v295 = vrot.slane %v290, %v294
    %v296 = vlaneseq
    %v297 = vshrl.u32 %v296, 7
    %v298 = vsub.s32 1, %v297
    %v299 = vrot.slane %v290, %v298
    %302 = vmatprep.subr.mxu0 %v259
    %303 = vmatpush1.msra.mxu0 %v258
    %304 = vmatprep.subr.mxu0 %v261
    %305 = vmatpush1.msra.mxu0 %v260
    %306 = vmatprep.subr.mxu0 %v263
    %307 = vmatpush1.msra.mxu0 %v262
    %308 = vmatprep.subr.mxu0 %v265
    %309 = vmatpush1.msra.mxu0 %v264
    %310 = vmatprep.subr.mxu0 %v267
    %311 = vmatpush1.msra.mxu0 %v266
    %312 = vmatprep.subr.mxu0 %v269
    %313 = vmatpush1.msra.mxu0 %v268
    %314 = vmatprep.subr.mxu0 %v271
    %315 = vmatpush1.msra.mxu0 %v270
    %316 = vmatprep.subr.mxu0 %v273
    %317 = vmatpush1.msra.mxu0 %v272
    %318 = vmatprep.subr.mxu0 %v275
    %319 = vmatpush1.msra.mxu0 %v274
    %320 = vmatprep.subr.mxu0 %v277
    %321 = vmatpush1.msra.mxu0 %v276
    %322 = vmatprep.subr.mxu0 %v279
    %323 = vmatpush1.msra.mxu0 %v278
    %324 = vmatprep.subr.mxu0 %v281
    %325 = vmatpush1.msra.mxu0 %v280
    %326 = vmatprep.subr.mxu0 %v283
    %327 = vmatpush1.msra.mxu0 %v282
    %328 = vmatprep.subr.mxu0 %v285
    %329 = vmatpush1.msra.mxu0 %v284
    %330 = vmatprep.subr.mxu0 %v287
    %331 = vmatpush1.msra.mxu0 %v286
    %332 = vmatprep.subr.mxu0 %v289
    %333 = vmatpush1.msra.mxu0 %v288
    %334 = vmatprep.subr.mxu0 0.0
    %335 = vmatpush1.msra.mxu0 0.0
    %336 = vmatprep.subr.mxu0 0.0
    %337 = vmatpush1.msra.mxu0 0.0
    %338 = vmatprep.subr.mxu0 0.0
    %339 = vmatpush1.msra.mxu0 0.0
    %340 = vmatprep.subr.mxu0 0.0
    %341 = vmatpush1.msra.mxu0 0.0
    %342 = vmatprep.subr.mxu0 0.0
    %343 = vmatpush1.msra.mxu0 0.0
    %344 = vmatprep.subr.mxu0 0.0
    %345 = vmatpush1.msra.mxu0 0.0
    %346 = vmatprep.subr.mxu0 0.0
    %347 = vmatpush1.msra.mxu0 0.0
    %348 = vmatprep.subr.mxu0 0.0
    %349 = vmatpush1.msra.mxu0 0.0
    %350 = vmatprep.subr.mxu0 0.0
    %351 = vmatpush1.msra.mxu0 0.0
    %352 = vmatprep.subr.mxu0 0.0
    %353 = vmatpush1.msra.mxu0 0.0
    %354 = vmatprep.subr.mxu0 0.0
    %355 = vmatpush1.msra.mxu0 0.0
    %356 = vmatprep.subr.mxu0 0.0
    %357 = vmatpush1.msra.mxu0 0.0
    %358 = vmatprep.subr.mxu0 0.0
    %359 = vmatpush1.msra.mxu0 0.0
    %360 = vmatprep.subr.mxu0 0.0
    %361 = vmatpush1.msra.mxu0 0.0
    %362 = vmatprep.subr.mxu0 0.0
    %363 = vmatpush1.msra.mxu0 0.0
    %364 = vmatprep.subr.mxu0 0.0
    %365 = vmatpush1.msra.mxu0 0.0
    %366 = vmatprep.mubr.f32.mxu0 0.0
    %367 = vmatmul.mubr.f32.gmra.mrb[0].mxu0 %v140
    %v368 = vpop.f32.mrb[0].mxu0
    %v369 = vadd.f32 %v295, %v368
    %v370 = vpop.f32.mrb[0].mxu0
    %v371 = vadd.f32 %v299, %v370
    %372 = vdwg.mxu0
    %373 = vst [vmem:[#allocation11] sm:$0xff] %v369
    %374 = vst [vmem:[#allocation11 + $0x8] sm:$0xff] %v371
    %v375 = vld [vmem:[#allocation5] sm:$0xff]
    %v376 = vld [vmem:[#allocation5 + $0x8] sm:$0xff]
    %v377 = vld [vmem:[#allocation5 + $0x30] sm:$0xff]
    %v378 = vld [vmem:[#allocation5 + $0x38] sm:$0xff]
    %v379 = vld [vmem:[#allocation5 + $0x60] sm:$0xff]
    %v380 = vld [vmem:[#allocation5 + $0x68] sm:$0xff]
    %v381 = vld [vmem:[#allocation5 + $0x90] sm:$0xff]
    %v382 = vld [vmem:[#allocation5 + $0x98] sm:$0xff]
    %v383 = vld [vmem:[#allocation5 + $0xc0] sm:$0xff]
    %v384 = vld [vmem:[#allocation5 + $0xc8] sm:$0xff]
    %v385 = vld [vmem:[#allocation5 + $0xf0] sm:$0xff]
    %v386 = vld [vmem:[#allocation5 + $0xf8] sm:$0xff]
    %v387 = vld [vmem:[#allocation5 + $0x120] sm:$0xff]
    %v388 = vld [vmem:[#allocation5 + $0x128] sm:$0xff]
    %v389 = vld [vmem:[#allocation5 + $0x150] sm:$0xff]
    %v390 = vld [vmem:[#allocation5 + $0x158] sm:$0xff]
    %v391 = vld [vmem:[#allocation5 + $0x180] sm:$0xff]
    %v392 = vld [vmem:[#allocation5 + $0x188] sm:$0xff]
    %v393 = vld [vmem:[#allocation5 + $0x1b0] sm:$0xff]
    %v394 = vld [vmem:[#allocation5 + $0x1b8] sm:$0xff]
    %v395 = vld [vmem:[#allocation5 + $0x1e0] sm:$0xff]
    %v396 = vld [vmem:[#allocation5 + $0x1e8] sm:$0xff]
    %v397 = vld [vmem:[#allocation5 + $0x210] sm:$0xff]
    %v398 = vld [vmem:[#allocation5 + $0x218] sm:$0xff]
    %v399 = vld [vmem:[#allocation5 + $0x240] sm:$0xff]
    %v400 = vld [vmem:[#allocation5 + $0x248] sm:$0xff]
    %v401 = vld [vmem:[#allocation5 + $0x270] sm:$0xff]
    %v402 = vld [vmem:[#allocation5 + $0x278] sm:$0xff]
    %v403 = vld [vmem:[#allocation5 + $0x2a0] sm:$0xff]
    %v404 = vld [vmem:[#allocation5 + $0x2a8] sm:$0xff]
    %v405 = vld [vmem:[#allocation5 + $0x2d0] sm:$0xff]
    %v406 = vld [vmem:[#allocation5 + $0x2d8] sm:$0xff]
    %v407 = vld [vmem:[%s5] sm:$0x3]
    %v409 = vlaneseq
    %v410 = vshrl.u32 %v409, 7
    %v411 = vsub.s32 0, %v410
    %v412 = vrot.slane %v407, %v411
    %v413 = vlaneseq
    %v414 = vshrl.u32 %v413, 7
    %v415 = vsub.s32 1, %v414
    %v416 = vrot.slane %v407, %v415
    %419 = vmatprep.subr.mxu0 %v376
    %420 = vmatpush1.msra.mxu0 %v375
    %421 = vmatprep.subr.mxu0 %v378
    %422 = vmatpush1.msra.mxu0 %v377
    %423 = vmatprep.subr.mxu0 %v380
    %424 = vmatpush1.msra.mxu0 %v379
    %425 = vmatprep.subr.mxu0 %v382
    %426 = vmatpush1.msra.mxu0 %v381
    %427 = vmatprep.subr.mxu0 %v384
    %428 = vmatpush1.msra.mxu0 %v383
    %429 = vmatprep.subr.mxu0 %v386
    %430 = vmatpush1.msra.mxu0 %v385
    %431 = vmatprep.subr.mxu0 %v388
    %432 = vmatpush1.msra.mxu0 %v387
    %433 = vmatprep.subr.mxu0 %v390
    %434 = vmatpush1.msra.mxu0 %v389
    %435 = vmatprep.subr.mxu0 %v392
    %436 = vmatpush1.msra.mxu0 %v391
    %437 = vmatprep.subr.mxu0 %v394
    %438 = vmatpush1.msra.mxu0 %v393
    %439 = vmatprep.subr.mxu0 %v396
    %440 = vmatpush1.msra.mxu0 %v395
    %441 = vmatprep.subr.mxu0 %v398
    %442 = vmatpush1.msra.mxu0 %v397
    %443 = vmatprep.subr.mxu0 %v400
    %444 = vmatpush1.msra.mxu0 %v399
    %445 = vmatprep.subr.mxu0 %v402
    %446 = vmatpush1.msra.mxu0 %v401
    %447 = vmatprep.subr.mxu0 %v404
    %448 = vmatpush1.msra.mxu0 %v403
    %449 = vmatprep.subr.mxu0 %v406
    %450 = vmatpush1.msra.mxu0 %v405
    %451 = vmatprep.subr.mxu0 0.0
    %452 = vmatpush1.msra.mxu0 0.0
    %453 = vmatprep.subr.mxu0 0.0
    %454 = vmatpush1.msra.mxu0 0.0
    %455 = vmatprep.subr.mxu0 0.0
    %456 = vmatpush1.msra.mxu0 0.0
    %457 = vmatprep.subr.mxu0 0.0
    %458 = vmatpush1.msra.mxu0 0.0
    %459 = vmatprep.subr.mxu0 0.0
    %460 = vmatpush1.msra.mxu0 0.0
    %461 = vmatprep.subr.mxu0 0.0
    %462 = vmatpush1.msra.mxu0 0.0
    %463 = vmatprep.subr.mxu0 0.0
    %464 = vmatpush1.msra.mxu0 0.0
    %465 = vmatprep.subr.mxu0 0.0
    %466 = vmatpush1.msra.mxu0 0.0
    %467 = vmatprep.subr.mxu0 0.0
    %468 = vmatpush1.msra.mxu0 0.0
    %469 = vmatprep.subr.mxu0 0.0
    %470 = vmatpush1.msra.mxu0 0.0
    %471 = vmatprep.subr.mxu0 0.0
    %472 = vmatpush1.msra.mxu0 0.0
    %473 = vmatprep.subr.mxu0 0.0
    %474 = vmatpush1.msra.mxu0 0.0
    %475 = vmatprep.subr.mxu0 0.0
    %476 = vmatpush1.msra.mxu0 0.0
    %477 = vmatprep.subr.mxu0 0.0
    %478 = vmatpush1.msra.mxu0 0.0
    %479 = vmatprep.subr.mxu0 0.0
    %480 = vmatpush1.msra.mxu0 0.0
    %481 = vmatprep.subr.mxu0 0.0
    %482 = vmatpush1.msra.mxu0 0.0
    %483 = vmatprep.mubr.f32.mxu0 0.0
    %484 = vmatmul.mubr.f32.gmra.mrb[0].mxu0 %v140
    %v485 = vpop.f32.mrb[0].mxu0
    %v486 = vadd.f32 %v412, %v485
    %v487 = vpop.f32.mrb[0].mxu0
    %v488 = vadd.f32 %v416, %v487
    %489 = vdwg.mxu0
    %v490 = vmax.f32 %v486, %v488
    %491 = vmax.xlane.f32.xlu0 %v490
    %v492 = vpop.xlane.xlu0 %491
    %v493 = vsub.f32 %v486, %v492
    %v494 = vsub.f32 %v488, %v492
    %v495 = vmul.f32 %v493, 1.442695
    %v496 = vpow.pop %v495
    %v497 = vmul.f32 %v494, 1.442695
    %v498 = vpow.pop %v497
    %v499 = vadd.f32 %v496, %v498
    %500 = vadd.xlane.f32.xlu0 %v499
    %v501 = vpop.xlane.xlu0 %500
    %v502 = vrcp.pop %v501
    %v503 = vmul.f32 %v496, %v502
    %v504 = vmul.f32 %v498, %v502
    %505 = vst [vmem:[#allocation7] sm:$0xff] %v503
    %506 = vst [vmem:[#allocation7 + $0x8] sm:$0xff] %v504
    %v507 = vld [vmem:[%s1] sm:$0xff]
    %v508 = vmul.f32 %v507, 1.442695
    %v509 = vpow.pop %v508
    %511 = vset.pattern.permute.xlu0 0
    %512 = vperm.xlu0 %511, %v509
    %v513 = vpop.permute.xlu0 %512
    %v515 = vmul.f32 %v513, %v503
    %v516 = vmul.f32 %v513, %v504
    %517 = vst [vmem:[#allocation10] sm:$0xff] %v515
    %518 = vst [vmem:[#allocation10 + $0x8] sm:$0xff] %v516
    // Predicated region
    $region34: #{tpu_custom_call.1} parent=1 // pred_check
      _
    $region35: #{tpu_custom_call.1} parent=1 // pred_check_branch
      %520 = sbr.rel (0) target = $region37
    $region36: #{tpu_custom_call.1} parent=1 // pred_region
      %s522 = ssub.s32 256, 256
      %523 = vsyncadd [#allocation4], %s522
      %s525 = sshll.u32 [#allocation7], 4
      %s526 = int_to_ptr.vmem [resolvable:$true] %s525
      %528 = dma.vmem_to_hbm [thread:$0]  %s526, 256, %s6, [#allocation4]
    $region37: #{tpu_custom_call.1} parent=1 // pred_fallthru
      _
    // Predicated region
    $region38: #{tpu_custom_call.1} parent=1 // pred_check
      _
    $region39: #{tpu_custom_call.1} parent=1 // pred_check_branch
      %530 = sbr.rel (0) target = $region41
    $region40: #{tpu_custom_call.1} parent=1 // pred_region
      %s532 = ssub.s32 256, 256
      %533 = vsyncadd [#allocation9], %s532
      %s535 = sshll.u32 [#allocation8], 4
      %s536 = int_to_ptr.vmem [resolvable:$true] %s535
      %538 = dma.vmem_to_hbm [thread:$0]  %s536, 256, %s7, [#allocation9]
    $region41: #{tpu_custom_call.1} parent=1 // pred_fallthru
      _
    // Predicated region
    $region42: #{tpu_custom_call.1} parent=1 // pred_check
      _
    $region43: #{tpu_custom_call.1} parent=1 // pred_check_branch
      %540 = sbr.rel (0) target = $region45
    $region44: #{tpu_custom_call.1} parent=1 // pred_region
      %s542 = ssub.s32 256, 256
      %543 = vsyncadd [#allocation9], %s542
      %s545 = sshll.u32 [#allocation10], 4
      %s546 = int_to_ptr.vmem [resolvable:$true] %s545
      %548 = dma.vmem_to_hbm [thread:$0]  %s546, 256, %s8, [#allocation9]
    $region45: #{tpu_custom_call.1} parent=1 // pred_fallthru
      _
    // Predicated region
    $region46: #{tpu_custom_call.1} parent=1 // pred_check
      _
    $region47: #{tpu_custom_call.1} parent=1 // pred_check_branch
      %550 = sbr.rel (0) target = $region49
    $region48: #{tpu_custom_call.1} parent=1 // pred_region
      %s552 = ssub.s32 256, 256
      %553 = vsyncadd [#allocation12], %s552
      %s555 = sshll.u32 [#allocation11], 4
      %s556 = int_to_ptr.vmem [resolvable:$true] %s555
      %558 = dma.vmem_to_hbm [thread:$0]  %s556, 256, %s9, [#allocation12]
    $region49: #{tpu_custom_call.1} parent=1 // pred_fallthru
      _
    // Predicated region
    $region50: #{tpu_custom_call.1} parent=1 // pred_check
      _
    $region51: #{tpu_custom_call.1} parent=1 // pred_check_branch
      %560 = sbr.rel (0) target = $region53
    $region52: #{tpu_custom_call.1} parent=1 // pred_region
      %561 = dma.done [#allocation4], 256
    $region53: #{tpu_custom_call.1} parent=1 // pred_fallthru
      _
    // Predicated region
    $region54: #{tpu_custom_call.1} parent=1 // pred_check
      _
    $region55: #{tpu_custom_call.1} parent=1 // pred_check_branch
      %563 = sbr.rel (0) target = $region57
    $region56: #{tpu_custom_call.1} parent=1 // pred_region
      %564 = dma.done [#allocation9], 256
    $region57: #{tpu_custom_call.1} parent=1 // pred_fallthru
      _
    // Predicated region
    $region58: #{tpu_custom_call.1} parent=1 // pred_check
      _
    $region59: #{tpu_custom_call.1} parent=1 // pred_check_branch
      %566 = sbr.rel (0) target = $region61
    $region60: #{tpu_custom_call.1} parent=1 // pred_region
      %567 = dma.done [#allocation9], 256
    $region61: #{tpu_custom_call.1} parent=1 // pred_fallthru
      _
    // Predicated region
    $region62: #{tpu_custom_call.1} parent=1 // pred_check
      _
    $region63: #{tpu_custom_call.1} parent=1 // pred_check_branch
      %569 = sbr.rel (0) target = $region65
    $region64: #{tpu_custom_call.1} parent=1 // pred_region
      %570 = dma.done [#allocation12], 256
    $region65: #{tpu_custom_call.1} parent=1 // pred_fallthru
      _
    %571 = vsyncpa [#allocation3], 1
    %572 = vsyncpa [#allocation6], 1
    %573 = vsyncpa [#allocation4], 1
    %574 = vsyncpa [#allocation9], 1
    %575 = vsyncpa [#allocation12], 1

</llo_original>
